<compile_context>
chip_gen: v6e
topology: v6e:2x2x1
jax: 0.10.0
libtpu: 0.0.40
codegen_flags: <defaults>
</compile_context>

<pallas_src>
from functools import partial

import numpy as np
import jax
import jax.numpy as jnp
from jax.experimental import pallas as pl
from jax.experimental.pallas import tpu as pltpu


def _head_mlp_kernel(x_ref, w1_ref, b1_ref, w2_ref, b2_ref, out_ref):
    # Linear1 (MXU, f32 accumulation) + bias + ReLU in f32.
    h = jnp.dot(x_ref[...], w1_ref[...], preferred_element_type=jnp.float32)
    h = jnp.maximum(h + b1_ref[...], 0.0)
    # TODO(synk): nn.Dropout(p) is identity in eval mode; training-mode dropout
    # (pltpu.prng_random_bits mask + 1/(1-p) rescale) is not implemented here.
    # Second matmul in the compute dtype (bf16 when enabled), accumulate in f32.
    h = h.astype(w2_ref.dtype)
    y = jnp.dot(h, w2_ref[...], preferred_element_type=jnp.float32)
    out_ref[...] = (y + b2_ref[...]).astype(out_ref.dtype)


def _round_up(x, m):
    return ((x + m - 1) // m) * m


def _cdiv(a, b):
    return -(-a // b)


@partial(jax.jit, static_argnames=("block_rows", "use_bf16"))
def head_module_forward(x, w1, b1, w2, b2, *, block_rows=2048, use_bf16=True):
    """JAX/Pallas equivalent of HeadModule.forward (eval mode).

    x:  (..., inp_size)
    w1: (inp_size, hidden)   b1: (hidden,)
    w2: (hidden, out_size)   b2: (out_size,)
    Returns (..., out_size) float32.

    use_bf16: feed x/W1/W2 (and the post-ReLU activation) to the MXU in bf16
    with f32 accumulation.  Slight numeric change vs a pure-f32 reference; pass
    use_bf16=False if bit-accuracy against the f32 torch module matters.
    """
    lead_shape = x.shape[:-1]
    d_in = int(x.shape[-1])
    hidden = int(w1.shape[1])
    d_out = int(w2.shape[1])

    cdtype = jnp.bfloat16 if use_bf16 else jnp.float32
    sub = 16 if use_bf16 else 8  # native sublane granularity of the x/out tiles

    # Collapse leading dims; kernel works on a lane-dense (rows, feature) slab.
    # (If the caller already holds activations in bf16, pass them directly and
    # the cast below is a no-op; under jit the convert fuses with the producer.)
    x2 = x.reshape(-1, d_in).astype(cdtype)
    n = x2.shape[0]

    # Tiny pad to sublane alignment only (<= sub-1 rows); NOT to a tile multiple.
    n_pad = _round_up(max(n, 1), sub)
    if n_pad != n:
        x2 = jnp.pad(x2, ((0, n_pad - n), (0, 0)))

    # Row tile: as large as possible (amortize per-step overhead), multiple of
    # the sublane granularity, but capped so the grid keeps >= ~4 steps so the
    # "parallel" axis can be sharded across v7x's two TensorCores.
    target = max(sub, (min(block_rows, n_pad) // sub) * sub)
    cap = _round_up(_cdiv(n_pad, 4), sub)
    tm = max(sub, min(target, cap))
    grid = _cdiv(n_pad, tm)  # last block may be partial; Pallas clips reads/writes

    w1c = jnp.asarray(w1, cdtype)
    w2c = jnp.asarray(w2, cdtype)
    b1_2d = jnp.asarray(b1, jnp.float32).reshape(1, hidden)
    b2_2d = jnp.asarray(b2, jnp.float32).reshape(1, d_out)

    grid_spec = pltpu.PrefetchScalarGridSpec(
        num_scalar_prefetch=0,
        grid=(grid,),
        in_specs=[
            pl.BlockSpec((tm, d_in), lambda i: (i, 0)),       # x row tile
            pl.BlockSpec((d_in, hidden), lambda i: (0, 0)),   # W1 (VMEM-resident)
            pl.BlockSpec((1, hidden), lambda i: (0, 0)),      # b1 (f32)
            pl.BlockSpec((hidden, d_out), lambda i: (0, 0)),  # W2 (VMEM-resident)
            pl.BlockSpec((1, d_out), lambda i: (0, 0)),       # b2 (f32)
        ],
        # Final lane-dense layout; d_out left at its natural width (no 128 pad:
        # that would multiply output HBM bytes in an HBM-bound kernel).
        out_specs=pl.BlockSpec((tm, d_out), lambda i: (i, 0)),
    )

    out = pl.pallas_call(
        _head_mlp_kernel,
        out_shape=jax.ShapeDtypeStruct((n_pad, d_out), jnp.float32),
        grid_spec=grid_spec,
        compiler_params=pltpu.CompilerParams(
            # Row tiles are independent (no carried accumulator) -> megacore
            # shardable on v7x; neutral on v5e/v6e.
            dimension_semantics=("parallel",),
        ),
    )(x2, w1c, b1_2d, w2c, b2_2d)

    return out[:n].reshape(lead_shape + (d_out,))


def _reference(x, w1, b1, w2, b2, use_bf16):
    """Numpy reference of the torch forward (eval mode: Dropout = identity;
    nn.ReLU('relu') is plain ReLU -- the string only sets `inplace`).
    When use_bf16, emulate the kernel's input/activation quantization."""
    def q(a):
        a = jnp.asarray(a, jnp.float32)
        if use_bf16:
            a = a.astype(jnp.bfloat16).astype(jnp.float32)
        return np.asarray(a)

    xq, w1q, w2q = q(x.reshape(-1, x.shape[-1])), q(w1), q(w2)
    h = np.maximum(xq @ w1q + np.asarray(b1, np.float32), 0.0)
    y = q(h) @ w2q + np.asarray(b2, np.float32)
    return y.reshape(x.shape[:-1] + (w2.shape[1],))


if __name__ == "__main__":
    INP, HID, OUT = 32, 64, 16

    key = jax.random.PRNGKey(0)
    kx1, kx2, kx3, kw1, kb1, kw2, kb2 = jax.random.split(key, 7)

    # torch nn.Linear default init scale: U(-1/sqrt(fan_in), 1/sqrt(fan_in)).
    w1 = jax.random.uniform(kw1, (INP, HID), jnp.float32, -1.0, 1.0) / np.sqrt(INP)
    b1 = jax.random.uniform(kb1, (HID,), jnp.float32, -1.0, 1.0) / np.sqrt(INP)
    w2 = jax.random.uniform(kw2, (HID, OUT), jnp.float32, -1.0, 1.0) / np.sqrt(HID)
    b2 = jax.random.uniform(kb2, (OUT,), jnp.float32, -1.0, 1.0) / np.sqrt(HID)

    # Case 1: pure-f32 path, simple (batch, inp_size) input.
    x_a = jax.random.normal(kx1, (8, INP), jnp.float32)
    out_a = jax.block_until_ready(
        head_module_forward(x_a, w1, b1, w2, b2, use_bf16=False))
    ref_a = _reference(x_a, w1, b1, w2, b2, use_bf16=False)
    assert out_a.shape == ref_a.shape, (out_a.shape, ref_a.shape)
    assert np.allclose(np.asarray(out_a), ref_a, rtol=1e-2, atol=1e-2), \
        float(np.max(np.abs(np.asarray(out_a) - ref_a)))

    # Case 2: default bf16 path, extra leading dims + rows needing sublane pad.
    x_b = jax.random.normal(kx2, (2, 3, INP), jnp.float32)
    out_b = jax.block_until_ready(head_module_forward(x_b, w1, b1, w2, b2))
    ref_b = _reference(x_b, w1, b1, w2, b2, use_bf16=True)
    assert out_b.shape == ref_b.shape, (out_b.shape, ref_b.shape)
    assert np.allclose(np.asarray(out_b), ref_b, rtol=1e-2, atol=1e-2), \
        float(np.max(np.abs(np.asarray(out_b) - ref_b)))

    # Case 3: bf16 path, larger batch -> multi-step grid + partial boundary block.
    x_c = jax.random.normal(kx3, (520, INP), jnp.float32)
    out_c = jax.block_until_ready(head_module_forward(x_c, w1, b1, w2, b2))
    ref_c = _reference(x_c, w1, b1, w2, b2, use_bf16=True)
    assert out_c.shape == ref_c.shape, (out_c.shape, ref_c.shape)
    assert np.allclose(np.asarray(out_c), ref_c, rtol=1e-2, atol=1e-2), \
        float(np.max(np.abs(np.asarray(out_c) - ref_c)))

    print("KERNEL_OK")
</pallas_src>

<mosaic_0001>
module attributes {stable_mosaic.version = 11 : i64} {
  func.func @_head_mlp_kernel(%arg0: i32, %arg1: memref<8x32xf32, #tpu.memory_space<vmem>>, %arg2: memref<32x64xf32, #tpu.memory_space<vmem>>, %arg3: memref<1x64xf32, #tpu.memory_space<vmem>>, %arg4: memref<64x16xf32, #tpu.memory_space<vmem>>, %arg5: memref<1x16xf32, #tpu.memory_space<vmem>>, %arg6: memref<8x16xf32, #tpu.memory_space<vmem>>) attributes {dimension_semantics = [#tpu.dimension_semantics<parallel>], iteration_bounds = array<i64: 1>, scalar_prefetch = 0 : i64, scratch_operands = 0 : i64, tpu.core_type = #tpu.core_type<tc>, window_params = [{transform_indices = @transform_0, window_bounds = array<i64: 8, 32>}, {pipeline_mode = #tpu.pipeline_mode<synchronous>, transform_indices = @transform_1, window_bounds = array<i64: 32, 64>}, {pipeline_mode = #tpu.pipeline_mode<synchronous>, transform_indices = @transform_2, window_bounds = array<i64: 1, 64>}, {pipeline_mode = #tpu.pipeline_mode<synchronous>, transform_indices = @transform_3, window_bounds = array<i64: 64, 16>}, {pipeline_mode = #tpu.pipeline_mode<synchronous>, transform_indices = @transform_4, window_bounds = array<i64: 1, 16>}, {transform_indices = @transform_5, window_bounds = array<i64: 8, 16>}]} {
    %c0 = arith.constant 0 : index
    %c0_0 = arith.constant 0 : index
    %0 = vector.load %arg1[%c0, %c0_0] : memref<8x32xf32, #tpu.memory_space<vmem>>, vector<8x32xf32>
    %c0_1 = arith.constant 0 : index
    %c0_2 = arith.constant 0 : index
    %1 = vector.load %arg2[%c0_1, %c0_2] : memref<32x64xf32, #tpu.memory_space<vmem>>, vector<32x64xf32>
    %cst = arith.constant dense<0.000000e+00> : vector<8x64xf32>
    %2 = tpu.matmul %0, %1, %cst {dimension_numbers = #tpu.dot_dimension_numbers<[1], [0], [0], [1], [0, 0, 1, 1], [], []>} : vector<8x32xf32>, vector<32x64xf32>, vector<8x64xf32> -> vector<8x64xf32>
    %c0_3 = arith.constant 0 : index
    %c0_4 = arith.constant 0 : index
    %3 = vector.load %arg3[%c0_3, %c0_4] : memref<1x64xf32, #tpu.memory_space<vmem>>, vector<1x64xf32>
    %4 = vector.broadcast %3 : vector<1x64xf32> to vector<8x64xf32>
    %5 = arith.addf %2, %4 : vector<8x64xf32>
    %cst_5 = arith.constant 0.000000e+00 : f32
    %6 = vector.broadcast %cst_5 : f32 to vector<8x64xf32>
    %7 = arith.maximumf %5, %6 : vector<8x64xf32>
    %c0_6 = arith.constant 0 : index
    %c0_7 = arith.constant 0 : index
    %8 = vector.load %arg4[%c0_6, %c0_7] : memref<64x16xf32, #tpu.memory_space<vmem>>, vector<64x16xf32>
    %cst_8 = arith.constant dense<0.000000e+00> : vector<8x16xf32>
    %9 = tpu.matmul %7, %8, %cst_8 {dimension_numbers = #tpu.dot_dimension_numbers<[1], [0], [0], [1], [0, 0, 1, 1], [], []>} : vector<8x64xf32>, vector<64x16xf32>, vector<8x16xf32> -> vector<8x16xf32>
    %c0_9 = arith.constant 0 : index
    %c0_10 = arith.constant 0 : index
    %10 = vector.load %arg5[%c0_9, %c0_10] : memref<1x16xf32, #tpu.memory_space<vmem>>, vector<1x16xf32>
    %11 = vector.broadcast %10 : vector<1x16xf32> to vector<8x16xf32>
    %12 = arith.addf %9, %11 : vector<8x16xf32>
    %c0_11 = arith.constant 0 : index
    %c0_12 = arith.constant 0 : index
    %13 = vector.load %arg6[%c0_11, %c0_12] : memref<8x16xf32, #tpu.memory_space<vmem>>, vector<8x16xf32>
    tpu.vector_store %arg6[%c0_11, %c0_12], %12 {strides = array<i32>} : memref<8x16xf32, #tpu.memory_space<vmem>>, vector<8x16xf32>,
    return
  }
  func.func @transform_0(%arg0: i32) -> (i32, i32) {
    %c0_i32 = arith.constant 0 : i32
    %c0_i32_0 = arith.constant 0 : i32
    return %arg0, %c0_i32 : i32, i32
  }
  func.func @transform_1(%arg0: i32) -> (i32, i32) {
    %c0_i32 = arith.constant 0 : i32
    %c0_i32_0 = arith.constant 0 : i32
    %c0_i32_1 = arith.constant 0 : i32
    return %c0_i32, %c0_i32_0 : i32, i32
  }
  func.func @transform_2(%arg0: i32) -> (i32, i32) {
    %c0_i32 = arith.constant 0 : i32
    %c0_i32_0 = arith.constant 0 : i32
    %c0_i32_1 = arith.constant 0 : i32
    return %c0_i32, %c0_i32_0 : i32, i32
  }
  func.func @transform_3(%arg0: i32) -> (i32, i32) {
    %c0_i32 = arith.constant 0 : i32
    %c0_i32_0 = arith.constant 0 : i32
    %c0_i32_1 = arith.constant 0 : i32
    return %c0_i32, %c0_i32_0 : i32, i32
  }
  func.func @transform_4(%arg0: i32) -> (i32, i32) {
    %c0_i32 = arith.constant 0 : i32
    %c0_i32_0 = arith.constant 0 : i32
    %c0_i32_1 = arith.constant 0 : i32
    return %c0_i32, %c0_i32_0 : i32, i32
  }
  func.func @transform_5(%arg0: i32) -> (i32, i32) {
    %c0_i32 = arith.constant 0 : i32
    %c0_i32_0 = arith.constant 0 : i32
    return %arg0, %c0_i32 : i32, i32
  }
}

</mosaic_0001>

<llo_original>
// kernel: head_module_forward.1
$region0: #{head_module_forward.1}
  #allocation0 [shape = 'u32[]', space=smem, size = 0x4, offset = 0x4, fixed_abs, tag = 'smem constant byte address 0x4 - core index']
  #allocation1 [shape = 'u32[144,128]{1,0:T(1,128)}', space=vmem, size = 0x12000, scoped, tag = 'internal scratch']
  %s0 = inlined_call_operand.vmem [shape: f32[8,32], index: 0, kind: input, shape index: {}]
  %s1 = inlined_call_operand.vmem [shape: f32[32,64], index: 1, kind: input, shape index: {}]
  %s2 = inlined_call_operand.vmem [shape: f32[1,64], index: 2, kind: input, shape index: {}]
  %s3 = inlined_call_operand.vmem [shape: f32[64,16], index: 3, kind: input, shape index: {}]
  %s4 = inlined_call_operand.vmem [shape: f32[1,16], index: 4, kind: input, shape index: {}]
  %s5 = inlined_call_operand.hbm [shape: f32[8,16], index: 5, kind: output, shape index: {}]
  %s6 = sld [smem:[#allocation0]]
  $region30: #{head_module_forward.1} parent=0
    _
  %s8 = ssub.s32 1, %s6
  %s9 = scalar_select 0, %s8, %s6
  $region1: #{head_module_forward.1} parent=0
    #allocation2 [shape = 'u8[4096]{0}', space=vmem, size = 0x1000, scoped, tag = 'output window, operand 0, single buffered']
    #allocation3 [shape = 's32[1]{0}', space=sflag, size = 0x4, scoped, tag = 'scoped memory for head_module_forward.1']
    %10 = vsyncpa [#allocation3], 0
    // Predicated region
    $region2: #{head_module_forward.1} parent=1 // pred_check
      _
    $region3: #{head_module_forward.1} parent=1 // pred_check_branch
      %12 = sbr.rel (0) target = $region5
    $region4: #{head_module_forward.1} parent=1 // pred_region
      _
    $region5: #{head_module_forward.1} parent=1 // pred_fallthru
      _
    // Predicated region
    $region6: #{head_module_forward.1} parent=1 // pred_check
      _
    $region7: #{head_module_forward.1} parent=1 // pred_check_branch
      %14 = sbr.rel (0) target = $region9
    $region8: #{head_module_forward.1} parent=1 // pred_region
      _
    $region9: #{head_module_forward.1} parent=1 // pred_fallthru
      _
    // Predicated region
    $region10: #{head_module_forward.1} parent=1 // pred_check
      _
    $region11: #{head_module_forward.1} parent=1 // pred_check_branch
      %16 = sbr.rel (0) target = $region13
    $region12: #{head_module_forward.1} parent=1 // pred_region
      _
    $region13: #{head_module_forward.1} parent=1 // pred_fallthru
      _
    // Predicated region
    $region14: #{head_module_forward.1} parent=1 // pred_check
      _
    $region15: #{head_module_forward.1} parent=1 // pred_check_branch
      %18 = sbr.rel (0) target = $region17
    $region16: #{head_module_forward.1} parent=1 // pred_region
      _
    $region17: #{head_module_forward.1} parent=1 // pred_fallthru
      _
    // Predicated region
    $region18: #{head_module_forward.1} parent=1 // pred_check
      _
    $region19: #{head_module_forward.1} parent=1 // pred_check_branch
      %20 = sbr.rel (0) target = $region21
    $region20: #{head_module_forward.1} parent=1 // pred_region
      _
    $region21: #{head_module_forward.1} parent=1 // pred_fallthru
      _
    %v21 = vld [vmem:[%s0] sm:$0xff]
    %v22 = vld [vmem:[%s1] sm:$0xff]
    %v23 = vld [vmem:[%s1 + $0x8] sm:$0xff]
    %v24 = vld [vmem:[%s1 + $0x10] sm:$0xff]
    %v25 = vld [vmem:[%s1 + $0x18] sm:$0xff]
    %v26 = vld [vmem:[%s2] sm:$0x1]
    %v28 = vlaneseq
    %v29 = vshrl.u32 %v28, 7
    %v30 = vsub.s32 0, %v29
    %v31 = vrot.slane %v26, %v30
    %vm33 = vcmask 261120
    %v35 = vsel %vm33, %v21, 0
    %37 = vmatprep.subr.mxu0 0.0
    %38 = vmatpush1.msra.mxu0 0.0
    %39 = vmatprep.subr.mxu0 0.0
    %40 = vmatpush1.msra.mxu0 0.0
    %41 = vmatprep.subr.mxu0 0.0
    %42 = vmatpush1.msra.mxu0 0.0
    %43 = vmatprep.subr.mxu0 0.0
    %44 = vmatpush1.msra.mxu0 0.0
    %45 = vmatprep.subr.mxu0 0.0
    %46 = vmatpush1.msra.mxu0 0.0
    %47 = vmatprep.subr.mxu0 0.0
    %48 = vmatpush1.msra.mxu0 0.0
    %49 = vmatprep.subr.mxu0 0.0
    %50 = vmatpush1.msra.mxu0 0.0
    %51 = vmatprep.subr.mxu0 0.0
    %52 = vmatpush1.msra.mxu0 0.0
    %53 = vmatprep.subr.mxu0 0.0
    %54 = vmatpush1.msra.mxu0 0.0
    %55 = vmatprep.subr.mxu0 0.0
    %56 = vmatpush1.msra.mxu0 0.0
    %57 = vmatprep.subr.mxu0 0.0
    %58 = vmatpush1.msra.mxu0 0.0
    %59 = vmatprep.subr.mxu0 0.0
    %60 = vmatpush1.msra.mxu0 0.0
    %61 = vmatprep.subr.mxu0 0.0
    %62 = vmatpush1.msra.mxu0 %v25
    %63 = vmatprep.subr.mxu0 0.0
    %64 = vmatpush1.msra.mxu0 %v24
    %65 = vmatprep.subr.mxu0 0.0
    %66 = vmatpush1.msra.mxu0 %v23
    %67 = vmatprep.subr.mxu0 0.0
    %68 = vmatpush1.msra.mxu0 %v22
    %69 = vmatprep.subr.mxu0 0.0
    %70 = vmatpush2.msra.mxu0 0.0
    %71 = vmatprep.subr.mxu0 0.0
    %72 = vmatpush2.msra.mxu0 0.0
    %73 = vmatprep.subr.mxu0 0.0
    %74 = vmatpush2.msra.mxu0 0.0
    %75 = vmatprep.subr.mxu0 0.0
    %76 = vmatpush2.msra.mxu0 0.0
    %77 = vmatprep.subr.mxu0 0.0
    %78 = vmatpush2.msra.mxu0 0.0
    %79 = vmatprep.subr.mxu0 0.0
    %80 = vmatpush2.msra.mxu0 0.0
    %81 = vmatprep.subr.mxu0 0.0
    %82 = vmatpush2.msra.mxu0 0.0
    %83 = vmatprep.subr.mxu0 0.0
    %84 = vmatpush2.msra.mxu0 0.0
    %85 = vmatprep.subr.mxu0 0.0
    %86 = vmatpush2.msra.mxu0 0.0
    %87 = vmatprep.subr.mxu0 0.0
    %88 = vmatpush2.msra.mxu0 0.0
    %89 = vmatprep.subr.mxu0 0.0
    %90 = vmatpush2.msra.mxu0 0.0
    %91 = vmatprep.subr.mxu0 0.0
    %92 = vmatpush2.msra.mxu0 0.0
    %93 = vmatprep.subr.mxu0 0.0
    %94 = vmatpush2.msra.mxu0 0.0
    %95 = vmatprep.subr.mxu0 0.0
    %96 = vmatpush2.msra.mxu0 0.0
    %97 = vmatprep.subr.mxu0 0.0
    %98 = vmatpush2.msra.mxu0 0.0
    %99 = vmatprep.subr.mxu0 0.0
    %100 = vmatpush2.msra.mxu0 0.0
    %101 = vmatprep.mubr.f32.mxu0 0.0
    %102 = vmatmul.mubr.f32.gmra.mxu0 %v35
    %v103 = vpop.f32.mrf.mxu0
    %v104 = vadd.f32 %v31, %v103
    %v105 = vpop.f32.mrf.mxu0
    %106 = vdwg.mxu0
    %v107 = vmax.f32 %v104, 0.0
    %v108 = vld [vmem:[%s3] sm:$0xff]
    %v109 = vld [vmem:[%s3 + $0x8] sm:$0xff]
    %v110 = vld [vmem:[%s3 + $0x10] sm:$0xff]
    %v111 = vld [vmem:[%s3 + $0x18] sm:$0xff]
    %v112 = vld [vmem:[%s3 + $0x20] sm:$0xff]
    %v113 = vld [vmem:[%s3 + $0x28] sm:$0xff]
    %v114 = vld [vmem:[%s3 + $0x30] sm:$0xff]
    %v115 = vld [vmem:[%s3 + $0x38] sm:$0xff]
    %v116 = vld [vmem:[%s4] sm:$0x1]
    %v118 = vlaneseq
    %v119 = vshrl.u32 %v118, 7
    %v120 = vsub.s32 0, %v119
    %v121 = vrot.slane %v116, %v120
    %vm123 = vcmask 523264
    %v125 = vsel %vm123, %v107, 0
    %127 = vmatprep.subr.mxu0 0.0
    %128 = vmatpush1.msra.mxu0 0.0
    %129 = vmatprep.subr.mxu0 0.0
    %130 = vmatpush1.msra.mxu0 0.0
    %131 = vmatprep.subr.mxu0 0.0
    %132 = vmatpush1.msra.mxu0 0.0
    %133 = vmatprep.subr.mxu0 0.0
    %134 = vmatpush1.msra.mxu0 0.0
    %135 = vmatprep.subr.mxu0 0.0
    %136 = vmatpush1.msra.mxu0 0.0
    %137 = vmatprep.subr.mxu0 0.0
    %138 = vmatpush1.msra.mxu0 0.0
    %139 = vmatprep.subr.mxu0 0.0
    %140 = vmatpush1.msra.mxu0 0.0
    %141 = vmatprep.subr.mxu0 0.0
    %142 = vmatpush1.msra.mxu0 0.0
    %143 = vmatprep.subr.mxu0 0.0
    %144 = vmatpush1.msra.mxu0 %v115
    %145 = vmatprep.subr.mxu0 0.0
    %146 = vmatpush1.msra.mxu0 %v114
    %147 = vmatprep.subr.mxu0 0.0
    %148 = vmatpush1.msra.mxu0 %v113
    %149 = vmatprep.subr.mxu0 0.0
    %150 = vmatpush1.msra.mxu0 %v112
    %151 = vmatprep.subr.mxu0 0.0
    %152 = vmatpush1.msra.mxu0 %v111
    %153 = vmatprep.subr.mxu0 0.0
    %154 = vmatpush1.msra.mxu0 %v110
    %155 = vmatprep.subr.mxu0 0.0
    %156 = vmatpush1.msra.mxu0 %v109
    %157 = vmatprep.subr.mxu0 0.0
    %158 = vmatpush1.msra.mxu0 %v108
    %159 = vmatprep.subr.mxu0 0.0
    %160 = vmatpush2.msra.mxu0 0.0
    %161 = vmatprep.subr.mxu0 0.0
    %162 = vmatpush2.msra.mxu0 0.0
    %163 = vmatprep.subr.mxu0 0.0
    %164 = vmatpush2.msra.mxu0 0.0
    %165 = vmatprep.subr.mxu0 0.0
    %166 = vmatpush2.msra.mxu0 0.0
    %167 = vmatprep.subr.mxu0 0.0
    %168 = vmatpush2.msra.mxu0 0.0
    %169 = vmatprep.subr.mxu0 0.0
    %170 = vmatpush2.msra.mxu0 0.0
    %171 = vmatprep.subr.mxu0 0.0
    %172 = vmatpush2.msra.mxu0 0.0
    %173 = vmatprep.subr.mxu0 0.0
    %174 = vmatpush2.msra.mxu0 0.0
    %175 = vmatprep.subr.mxu0 0.0
    %176 = vmatpush2.msra.mxu0 0.0
    %177 = vmatprep.subr.mxu0 0.0
    %178 = vmatpush2.msra.mxu0 0.0
    %179 = vmatprep.subr.mxu0 0.0
    %180 = vmatpush2.msra.mxu0 0.0
    %181 = vmatprep.subr.mxu0 0.0
    %182 = vmatpush2.msra.mxu0 0.0
    %183 = vmatprep.subr.mxu0 0.0
    %184 = vmatpush2.msra.mxu0 0.0
    %185 = vmatprep.subr.mxu0 0.0
    %186 = vmatpush2.msra.mxu0 0.0
    %187 = vmatprep.subr.mxu0 0.0
    %188 = vmatpush2.msra.mxu0 0.0
    %189 = vmatprep.subr.mxu0 0.0
    %190 = vmatpush2.msra.mxu0 0.0
    %191 = vmatprep.mubr.f32.mxu0 0.0
    %192 = vmatmul.mubr.f32.gmra.mxu0 %v125
    %v193 = vpop.f32.mrf.mxu0
    %v194 = vadd.f32 %v121, %v193
    %v195 = vpop.f32.mrf.mxu0
    %196 = vdwg.mxu0
    %vm197 = vcmask 130048
    %198 = vst.msk [vmem:[#allocation2] sm:$0xff] %vm197, %v194
    // Predicated region
    $region22: #{head_module_forward.1} parent=1 // pred_check
      _
    $region23: #{head_module_forward.1} parent=1 // pred_check_branch
      %200 = sbr.rel (0) target = $region25
    $region24: #{head_module_forward.1} parent=1 // pred_region
      %s202 = ssub.s32 128, 128
      %203 = vsyncadd [#allocation3], %s202
      %s205 = sshll.u32 [#allocation2], 4
      %s206 = int_to_ptr.vmem [resolvable:$true] %s205
      %208 = dma.vmem_to_hbm [thread:$0]  %s206, 128, %s5, [#allocation3]
    $region25: #{head_module_forward.1} parent=1 // pred_fallthru
      _
    // Predicated region
    $region26: #{head_module_forward.1} parent=1 // pred_check
      _
    $region27: #{head_module_forward.1} parent=1 // pred_check_branch
      %210 = sbr.rel (0) target = $region29
    $region28: #{head_module_forward.1} parent=1 // pred_region
      %211 = dma.done [#allocation3], 128
    $region29: #{head_module_forward.1} parent=1 // pred_fallthru
      _
    %212 = vsyncpa [#allocation3], 1

</llo_original>
